<compile_context>
chip_gen: v5e
topology: v5e:2x2
jax: 0.10.0
libtpu: 0.0.40
codegen_flags: <defaults>
</compile_context>

<pallas_src>
import math
import jax
import jax.numpy as jnp
from jax.experimental import pallas as pl
from jax.experimental.pallas import tpu as pltpu

# -----------------------------------------------------------------------------
# Synthetic ATSS config (mirrors the cfg.MODEL.FCOS / cfg.MODEL.ATSS fields)
# -----------------------------------------------------------------------------
NUM_CLASSES = 8                 # cfg.MODEL.FCOS.NUM_CLASSES (small synthetic)
FPN_STRIDES = (8, 16)           # cfg.MODEL.FCOS.FPN_STRIDES (two levels)
FEAT_CHANNELS = 32              # FPN feature channels
BATCH = 2
IMG_H, IMG_W = 64, 64
PIXEL_MEAN = (103.530, 116.280, 123.675)
PIXEL_STD = (57.375, 57.120, 58.395)
PRIOR_PROB = 0.01               # FCOS classification bias prior
SHIFT_OFFSET = 0.5              # shift generator grid offset

# Lane-dense packed head-output layout (128 lanes wide):
HEAD_WIDTH = 128
COL_CLS = 0                             # [0, K)         cls logits
COL_BOX = NUM_CLASSES                   # [K, K+4)       decoded boxes (x1,y1,x2,y2)
COL_CTR = NUM_CLASSES + 4               # [K+4]          centerness logit
COL_DELTA = NUM_CLASSES + 5             # [K+5, K+9)     raw box deltas (l,t,r,b)


# -----------------------------------------------------------------------------
# Pallas kernels
# -----------------------------------------------------------------------------
def _preprocess_kernel(img_ref, mean_ref, inv_std_ref, out_ref):
    # (x - mean) * (1/std): sub + mul co-issue on the VPU; no slow divide.
    out_ref[...] = (img_ref[...] - mean_ref[...]) * inv_std_ref[...]


def _fused_head_decode_kernel(x_ref, w_ref, b_ref, shift_ref, raw_ref, score_ref):
    # One MXU matmul produces all head outputs in a 128-lane-wide tile:
    #   cols [0,K)      cls logits
    #   cols [K,K+4)    sign-folded deltas  (becomes decoded box after +shift)
    #   col  K+4        centerness logit
    #   cols [K+5,K+9)  raw deltas (l,t,r,b)
    acc = jnp.dot(x_ref[...], w_ref[...], preferred_element_type=jnp.float32)
    # shift_ref is zero everywhere except the box columns, where it holds
    # [sx, sy, sx, sy]  ->  box = shift + signed_delta as one full-width add.
    raw = acc + b_ref[...] + shift_ref[...]
    raw_ref[...] = raw
    # Decode epilogue (ATSS inference): predicted_prob = sqrt(sig(cls)*sig(ctr)).
    ctr_logit = raw[:, COL_CTR:COL_CTR + 1]
    score_ref[...] = jnp.sqrt(jax.nn.sigmoid(raw) * jax.nn.sigmoid(ctr_logit))


# -----------------------------------------------------------------------------
# Wrappers
# -----------------------------------------------------------------------------
def preprocess_images(images, pixel_mean, pixel_std):
    """(x - mean) / std on NCHW images, tiled along the lane (H*W) axis."""
    n, c, h, w = images.shape
    hw = h * w
    img2d = images.reshape(n * c, hw)
    mean2d = jnp.tile(pixel_mean.reshape(c, 1), (n, 1))          # (N*C, 1)
    inv2d = jnp.tile((1.0 / pixel_std).reshape(c, 1), (n, 1))    # (N*C, 1)

    # Lane-dense tile: >= 512 preferred; fall back to the full row if needed.
    t = hw
    for cand in (1024, 512, 256, 128):
        if hw % cand == 0:
            t = cand
            break

    out = pl.pallas_call(
        _preprocess_kernel,
        out_shape=jax.ShapeDtypeStruct(img2d.shape, jnp.float32),
        grid=(hw // t,),
        in_specs=[
            pl.BlockSpec((n * c, t), lambda i: (0, i)),
            pl.BlockSpec((n * c, 1), lambda i: (0, 0)),
            pl.BlockSpec((n * c, 1), lambda i: (0, 0)),
        ],
        out_specs=pl.BlockSpec((n * c, t), lambda i: (0, i)),
        compiler_params=pltpu.CompilerParams(dimension_semantics=("parallel",)),
    )(img2d, mean2d, inv2d)
    return out.reshape(n, c, h, w)


def fused_head_decode(x2d, shift_pad, w_full, b_full):
    """Single pallas_call: fused 1x1-conv heads + inference decode, all levels."""
    m, c = x2d.shape
    width = w_full.shape[1]

    # Row tile: multiple of 8, >= 2 grid steps (lets v7x shard across its 2 TCs),
    # large enough to amortize per-grid-step overhead.
    m8 = ((m + 7) // 8) * 8
    if m8 >= 512:
        tm = 256
    elif m8 >= 16:
        tm = max(8, ((m8 // 2) // 8) * 8)
    else:
        tm = 8
    m_pad = ((m + tm - 1) // tm) * tm
    if m_pad != m:
        x2d = jnp.pad(x2d, ((0, m_pad - m), (0, 0)))
        shift_pad = jnp.pad(shift_pad, ((0, m_pad - m), (0, 0)))

    raw, scores = pl.pallas_call(
        _fused_head_decode_kernel,
        out_shape=(
            jax.ShapeDtypeStruct((m_pad, width), jnp.float32),
            jax.ShapeDtypeStruct((m_pad, width), jnp.float32),
        ),
        grid=(m_pad // tm,),
        in_specs=[
            pl.BlockSpec((tm, c), lambda i: (i, 0)),
            pl.BlockSpec((c, width), lambda i: (0, 0)),
            pl.BlockSpec((1, width), lambda i: (0, 0)),
            pl.BlockSpec((tm, width), lambda i: (i, 0)),
        ],
        out_specs=(
            pl.BlockSpec((tm, width), lambda i: (i, 0)),
            pl.BlockSpec((tm, width), lambda i: (i, 0)),
        ),
        compiler_params=pltpu.CompilerParams(dimension_semantics=("parallel",)),
    )(x2d, w_full, b_full, shift_pad)
    return raw[:m], scores[:m]


def make_shifts(h, w, stride):
    """ShiftGenerator equivalent: one (x, y) shift per feature location."""
    ys = (jnp.arange(h, dtype=jnp.float32) + SHIFT_OFFSET) * stride
    xs = (jnp.arange(w, dtype=jnp.float32) + SHIFT_OFFSET) * stride
    yy, xx = jnp.meshgrid(ys, xs, indexing="ij")
    return jnp.stack([xx.reshape(-1), yy.reshape(-1)], axis=-1)  # (H*W, 2)


def init_params(key):
    k1, k2, k3 = jax.random.split(key, 3)
    w_cls = 0.01 * jax.random.normal(k1, (FEAT_CHANNELS, NUM_CLASSES), jnp.float32)
    w_box = 0.01 * jax.random.normal(k2, (FEAT_CHANNELS, 4), jnp.float32)
    w_ctr = 0.01 * jax.random.normal(k3, (FEAT_CHANNELS, 1), jnp.float32)
    b_cls = jnp.full((NUM_CLASSES,), -math.log((1.0 - PRIOR_PROB) / PRIOR_PROB),
                     jnp.float32)
    b_box = jnp.zeros((4,), jnp.float32)
    b_ctr = jnp.zeros((1,), jnp.float32)

    # Pack everything into one lane-dense (C, 128) weight / (1, 128) bias so the
    # whole head is a single unmasked-store MXU matmul.  The l/t minus-signs of
    # Shift2BoxTransform.apply_deltas (weights = 1,1,1,1) are folded in here.
    signs = jnp.asarray([-1.0, -1.0, 1.0, 1.0], jnp.float32)
    w_full = jnp.zeros((FEAT_CHANNELS, HEAD_WIDTH), jnp.float32)
    w_full = w_full.at[:, COL_CLS:COL_CLS + NUM_CLASSES].set(w_cls)
    w_full = w_full.at[:, COL_BOX:COL_BOX + 4].set(w_box * signs)
    w_full = w_full.at[:, COL_CTR].set(w_ctr[:, 0])
    w_full = w_full.at[:, COL_DELTA:COL_DELTA + 4].set(w_box)

    b_full = jnp.zeros((HEAD_WIDTH,), jnp.float32)
    b_full = b_full.at[COL_CLS:COL_CLS + NUM_CLASSES].set(b_cls)
    b_full = b_full.at[COL_BOX:COL_BOX + 4].set(b_box * signs)
    b_full = b_full.at[COL_CTR].set(b_ctr[0])
    b_full = b_full.at[COL_DELTA:COL_DELTA + 4].set(b_box)

    return {
        "pixel_mean": jnp.asarray(PIXEL_MEAN, jnp.float32),
        "pixel_std": jnp.asarray(PIXEL_STD, jnp.float32),
        "w_cls": w_cls, "w_box": w_box, "w_ctr": w_ctr,
        "b_cls": b_cls, "b_box": b_box, "b_ctr": b_ctr,
        "w_full": w_full,                       # (C, 128)
        "b_full": b_full.reshape(1, HEAD_WIDTH),  # (1, 128)
    }


def atss_forward(images, features_nchw, params):
    """Inference branch of ATSS.forward (dense part)."""
    # 1) preprocess_image (Pallas elementwise kernel, lane-tiled).
    images_norm = preprocess_images(images, params["pixel_mean"], params["pixel_std"])
    # TODO(synk): backbone (build_backbone) and the FCOSHead 3x3 conv towers are
    # external modules; synthetic FPN features are supplied directly.

    n = images.shape[0]
    feat_rows, shift_rows = [], []
    for feat, stride in zip(features_nchw, FPN_STRIDES):
        _, c, h, w = feat.shape
        # NCHW -> NHWC so the 1x1-conv head becomes a (rows, C) matmul; row order
        # per image is (level, h, w) == permute_to_N_HWA_K + concat semantics.
        feat_rows.append(jnp.transpose(feat, (0, 2, 3, 1)).reshape(n, h * w, c))
        shift_rows.append(make_shifts(h, w, stride))

    # permute_all_cls_and_box_to_N_HWA_K_and_concat equivalent (layout glue):
    # all FPN levels are merged into ONE (N*R, C) row block -> one pallas_call.
    x2d = jnp.concatenate(feat_rows, axis=1).reshape(-1, FEAT_CHANNELS)   # (N*R, C)
    shifts = jnp.tile(jnp.concatenate(shift_rows, axis=0), (n, 1))        # (N*R, 2)

    # Lane-dense shift block: zero except [sx, sy, sx, sy] in the box columns.
    m = x2d.shape[0]
    shift_pad = jnp.zeros((m, HEAD_WIDTH), jnp.float32)
    shift_pad = shift_pad.at[:, COL_BOX:COL_BOX + 2].set(shifts)
    shift_pad = shift_pad.at[:, COL_BOX + 2:COL_BOX + 4].set(shifts)

    # 2+3) fused head matmul + inference decode (single Pallas kernel).
    raw, scores_full = fused_head_decode(x2d, shift_pad,
                                         params["w_full"], params["b_full"])
    box_cls = raw[:, COL_CLS:COL_CLS + NUM_CLASSES]     # (N*R, K) logits
    boxes = raw[:, COL_BOX:COL_BOX + 4]                 # (N*R, 4) decoded boxes
    box_ctr = raw[:, COL_CTR:COL_CTR + 1]               # (N*R, 1) logit
    box_delta = raw[:, COL_DELTA:COL_DELTA + 4]         # (N*R, 4) raw deltas
    scores = scores_full[:, :NUM_CLASSES]               # (N*R, K)

    # TODO(synk): per-image sort/topk, score thresholding and
    # generalized_batched_nms are data-dependent selection ops left outside
    # the Pallas kernels.
    return images_norm, box_cls, box_ctr, box_delta, scores, boxes, shifts


if __name__ == "__main__":
    key = jax.random.PRNGKey(0)
    k_img, k_f0, k_f1, k_par = jax.random.split(key, 4)

    # images: NCHW, values in [0, 255] like raw detector inputs
    images = jax.random.uniform(k_img, (BATCH, 3, IMG_H, IMG_W),
                                jnp.float32, 0.0, 255.0)
    # synthetic FPN features (one per stride): (N, C, H/s, W/s)
    features = [
        jax.random.normal(k_f0, (BATCH, FEAT_CHANNELS,
                                 IMG_H // FPN_STRIDES[0], IMG_W // FPN_STRIDES[0]),
                          jnp.float32),
        jax.random.normal(k_f1, (BATCH, FEAT_CHANNELS,
                                 IMG_H // FPN_STRIDES[1], IMG_W // FPN_STRIDES[1]),
                          jnp.float32),
    ]
    params = init_params(k_par)

    outs = jax.block_until_ready(atss_forward(images, features, params))
    images_norm, box_cls, box_ctr, box_delta, scores, boxes, shifts = outs

    # 1) preprocess vs plain-JAX reference
    ref_norm = (images - params["pixel_mean"].reshape(1, 3, 1, 1)) \
        / params["pixel_std"].reshape(1, 3, 1, 1)
    assert jnp.allclose(images_norm, ref_norm, rtol=1e-5, atol=1e-4)

    # 2) fused decode epilogue vs the kernel's own head logits (tight check)
    ref_scores = jnp.sqrt(jax.nn.sigmoid(box_cls) * jax.nn.sigmoid(box_ctr))
    assert jnp.allclose(scores, ref_scores, rtol=1e-5, atol=1e-5)
    ref_boxes = jnp.concatenate(
        [shifts - box_delta[:, :2], shifts + box_delta[:, 2:]], axis=-1)
    assert jnp.allclose(boxes, ref_boxes, rtol=1e-5, atol=1e-4)

    # 3) head matmul vs plain-JAX reference (loose: MXU precision may differ)
    feat_rows = [jnp.transpose(f, (0, 2, 3, 1)).reshape(BATCH, -1, FEAT_CHANNELS)
                 for f in features]
    x2d_ref = jnp.concatenate(feat_rows, axis=1).reshape(-1, FEAT_CHANNELS)
    assert jnp.allclose(box_cls, x2d_ref @ params["w_cls"] + params["b_cls"],
                        rtol=1e-2, atol=5e-2)
    assert jnp.allclose(box_delta, x2d_ref @ params["w_box"] + params["b_box"],
                        rtol=1e-2, atol=1e-2)
    assert jnp.allclose(box_ctr, x2d_ref @ params["w_ctr"] + params["b_ctr"],
                        rtol=1e-2, atol=1e-2)

    assert bool(jnp.all(jnp.isfinite(scores))) and bool(jnp.all(jnp.isfinite(boxes)))
    print("KERNEL_OK")
</pallas_src>

<mosaic_0001>
module attributes {stable_mosaic.version = 11 : i64} {
  func.func @_preprocess_kernel(%arg0: i32, %arg1: memref<6x1024xf32, #tpu.memory_space<vmem>>, %arg2: memref<6x1xf32, #tpu.memory_space<vmem>>, %arg3: memref<6x1xf32, #tpu.memory_space<vmem>>, %arg4: memref<6x1024xf32, #tpu.memory_space<vmem>>) attributes {dimension_semantics = [#tpu.dimension_semantics<parallel>], iteration_bounds = array<i64: 4>, scalar_prefetch = 0 : i64, scratch_operands = 0 : i64, tpu.core_type = #tpu.core_type<tc>, window_params = [{transform_indices = @transform_0, window_bounds = array<i64: 6, 1024>}, {pipeline_mode = #tpu.pipeline_mode<synchronous>, transform_indices = @transform_1, window_bounds = array<i64: 6, 1>}, {pipeline_mode = #tpu.pipeline_mode<synchronous>, transform_indices = @transform_2, window_bounds = array<i64: 6, 1>}, {transform_indices = @transform_3, window_bounds = array<i64: 6, 1024>}]} {
    %c0 = arith.constant 0 : index
    %c0_0 = arith.constant 0 : index
    %0 = vector.load %arg1[%c0, %c0_0] : memref<6x1024xf32, #tpu.memory_space<vmem>>, vector<6x1024xf32>
    %c0_1 = arith.constant 0 : index
    %c0_2 = arith.constant 0 : index
    %1 = vector.load %arg2[%c0_1, %c0_2] : memref<6x1xf32, #tpu.memory_space<vmem>>, vector<6x1xf32>
    %2 = vector.broadcast %1 : vector<6x1xf32> to vector<6x1024xf32>
    %3 = arith.subf %0, %2 : vector<6x1024xf32>
    %c0_3 = arith.constant 0 : index
    %c0_4 = arith.constant 0 : index
    %4 = vector.load %arg3[%c0_3, %c0_4] : memref<6x1xf32, #tpu.memory_space<vmem>>, vector<6x1xf32>
    %5 = vector.broadcast %4 : vector<6x1xf32> to vector<6x1024xf32>
    %6 = arith.mulf %3, %5 : vector<6x1024xf32>
    %c0_5 = arith.constant 0 : index
    %c0_6 = arith.constant 0 : index
    %7 = vector.load %arg4[%c0_5, %c0_6] : memref<6x1024xf32, #tpu.memory_space<vmem>>, vector<6x1024xf32>
    tpu.vector_store %arg4[%c0_5, %c0_6], %6 {strides = array<i32>} : memref<6x1024xf32, #tpu.memory_space<vmem>>, vector<6x1024xf32>,
    return
  }
  func.func @transform_0(%arg0: i32) -> (i32, i32) {
    %c0_i32 = arith.constant 0 : i32
    %c0_i32_0 = arith.constant 0 : i32
    return %c0_i32, %arg0 : i32, i32
  }
  func.func @transform_1(%arg0: i32) -> (i32, i32) {
    %c0_i32 = arith.constant 0 : i32
    %c0_i32_0 = arith.constant 0 : i32
    %c0_i32_1 = arith.constant 0 : i32
    return %c0_i32, %c0_i32_0 : i32, i32
  }
  func.func @transform_2(%arg0: i32) -> (i32, i32) {
    %c0_i32 = arith.constant 0 : i32
    %c0_i32_0 = arith.constant 0 : i32
    %c0_i32_1 = arith.constant 0 : i32
    return %c0_i32, %c0_i32_0 : i32, i32
  }
  func.func @transform_3(%arg0: i32) -> (i32, i32) {
    %c0_i32 = arith.constant 0 : i32
    %c0_i32_0 = arith.constant 0 : i32
    return %c0_i32, %arg0 : i32, i32
  }
}

</mosaic_0001>

<llo_original>
// kernel: tpu_custom_call.1
$region0: #{tpu_custom_call.1}
  #allocation0 [shape = 'u32[]', space=smem, size = 0x4, offset = 0x4, fixed_abs, tag = 'smem constant byte address 0x4 - core index']
  #allocation1 [shape = 'u32[72,128]{1,0:T(1,128)}', space=vmem, size = 0x9000, scoped, tag = 'internal scratch']
  %s0 = inlined_call_operand.hbm [shape: f32[6,4096], index: 0, kind: input, shape index: {}]
  %s1 = inlined_call_operand.vmem [shape: f32[6,1], index: 1, kind: input, shape index: {}]
  %s2 = inlined_call_operand.vmem [shape: f32[6,1], index: 2, kind: input, shape index: {}]
  %s3 = inlined_call_operand.hbm [shape: f32[6,4096], index: 3, kind: output, shape index: {}]
  %s4 = sld [smem:[#allocation0]]
  $region49: #{tpu_custom_call.1} parent=0
    _
  %s6 = ssub.s32 1, %s4
  %s7 = scalar_select 0, %s6, %s4
  $region1: #{tpu_custom_call.1} parent=0
    #allocation2 [shape = 'u8[65536]{0}', space=vmem, size = 0x10000, scoped, tag = 'input window, operand 0']
    #allocation3 [shape = 's32[2]{0}', space=sflag, size = 0x8, scoped, tag = 'scoped memory for tpu_custom_call.1']
    #allocation4 [shape = 's32[2]{0}', space=sflag, size = 0x8, scoped, tag = 'scoped memory for tpu_custom_call.1']
    #allocation5 [shape = 'u8[65536]{0}', space=vmem, size = 0x10000, scoped, tag = 'output window, operand 0']
    %8 = vsyncpa [#allocation3], 0
    %s9 = scalar_lea.sflag [#allocation3], 1
    %10 = vsyncpa %s9, 0
    %11 = vsyncpa [#allocation4], 0
    %s12 = scalar_lea.sflag [#allocation4], 1
    %13 = vsyncpa %s12, 0
    loop: start=0, step=1, limit=6
    $region2: #{tpu_custom_call.1} parent=1 // loop_pre_header
      _
    $region3: #{tpu_custom_call.1} parent=1 // loop_header
      %s15 = sphi 0, %s19
      %p16 = scmp.ge.s32.totalorder %s15, 6
      %s25 = sphi 0, %s27
      %s28 = sphi 0, %s25
      %s29 = sphi 0, %s28
      %s45 = sphi 0, %s29
      %s49 = sphi 0, %s49
      %s51 = sphi 0, %s49
      %s52 = sphi 0, %s51
      %s66 = sphi 0, %s52
      %s70 = sphi 0, %s70
      %s72 = sphi 0, %s70
      %s73 = sphi 0, %s72
      %s87 = sphi 0, %s73
      %s93 = sphi 0, %s95
      %s96 = sphi 0, %s93
      %s97 = sphi 0, %s96
      %s113 = sphi 0, %s97
    $region4: #{tpu_custom_call.1} parent=1 // loop_header_branch
      %18 = sbr.rel (%p16) target = $region8
    $region5: #{tpu_custom_call.1} parent=1 // loop_body
      %s20 = ssub.s32 %s15, 1
      %s21 = ssub.s32 %s15, 2
      %s22 = sadd.s32 %s15, 1
      %s23 = ssub.s32 %s15, %s22
      %p24 = scmp.eq.s32.totalorder %s23, 0
      %s26 = sadd.s32 %s25, 1
      %s27 = scalar_select %p24, %s25, %s26
      %p30 = pneg %p24
      %p31 = scmp.eq.s32.totalorder %s15, 3
      %p32 = por %p30, %p31
      %p33 = scmp.ne.s32.totalorder %s25, %s28
      %p34 = scmp.eq.s32.totalorder %s15, 0
      %p35 = por %p33, %p34
      %p36 = scmp.ne.s32.totalorder %s25, %s28
      %p37 = scmp.eq.s32.totalorder %s20, 3
      %p38 = por %p36, %p37
      %p39 = scmp.ne.s32.totalorder %s28, %s29
      %p40 = scmp.eq.s32.totalorder %s20, 0
      %p41 = por %p39, %p40
      %p42 = scmp.ne.s32.totalorder %s28, %s29
      %p43 = scmp.eq.s32.totalorder %s21, 3
      %p44 = por %p42, %p43
      %p46 = scmp.ne.s32.totalorder %s29, %s45
      %p47 = scmp.eq.s32.totalorder %s21, 0
      %p48 = por %p46, %p47
      %s50 = sadd.s32 %s49, 1
      %p53 = scmp.eq.s32.totalorder %s15, 3
      %p54 = scmp.ne.s32.totalorder %s49, %s51
      %p55 = scmp.eq.s32.totalorder %s15, 0
      %p56 = por %p54, %p55
      %p57 = scmp.ne.s32.totalorder %s49, %s51
      %p58 = scmp.eq.s32.totalorder %s20, 3
      %p59 = por %p57, %p58
      %p60 = scmp.ne.s32.totalorder %s51, %s52
      %p61 = scmp.eq.s32.totalorder %s20, 0
      %p62 = por %p60, %p61
      %p63 = scmp.ne.s32.totalorder %s51, %s52
      %p64 = scmp.eq.s32.totalorder %s21, 3
      %p65 = por %p63, %p64
      %p67 = scmp.ne.s32.totalorder %s52, %s66
      %p68 = scmp.eq.s32.totalorder %s21, 0
      %p69 = por %p67, %p68
      %s71 = sadd.s32 %s70, 1
      %p74 = scmp.eq.s32.totalorder %s15, 3
      %p75 = scmp.ne.s32.totalorder %s70, %s72
      %p76 = scmp.eq.s32.totalorder %s15, 0
      %p77 = por %p75, %p76
      %p78 = scmp.ne.s32.totalorder %s70, %s72
      %p79 = scmp.eq.s32.totalorder %s20, 3
      %p80 = por %p78, %p79
      %p81 = scmp.ne.s32.totalorder %s72, %s73
      %p82 = scmp.eq.s32.totalorder %s20, 0
      %p83 = por %p81, %p82
      %p84 = scmp.ne.s32.totalorder %s72, %s73
      %p85 = scmp.eq.s32.totalorder %s21, 3
      %p86 = por %p84, %p85
      %p88 = scmp.ne.s32.totalorder %s73, %s87
      %p89 = scmp.eq.s32.totalorder %s21, 0
      %p90 = por %p88, %p89
      %s91 = ssub.s32 %s15, %s22
      %p92 = scmp.eq.s32.totalorder %s91, 0
      %s94 = sadd.s32 %s93, 1
      %s95 = scalar_select %p92, %s93, %s94
      %p98 = pneg %p92
      %p99 = scmp.eq.s32.totalorder %s15, 3
      %p100 = por %p98, %p99
      %p101 = scmp.ne.s32.totalorder %s93, %s96
      %p102 = scmp.eq.s32.totalorder %s15, 0
      %p103 = por %p101, %p102
      %p104 = scmp.ne.s32.totalorder %s93, %s96
      %p105 = scmp.eq.s32.totalorder %s20, 3
      %p106 = por %p104, %p105
      %p107 = scmp.ne.s32.totalorder %s96, %s97
      %p108 = scmp.eq.s32.totalorder %s20, 0
      %p109 = por %p107, %p108
      %p110 = scmp.ne.s32.totalorder %s96, %s97
      %p111 = scmp.eq.s32.totalorder %s21, 3
      %p112 = por %p110, %p111
      %p114 = scmp.ne.s32.totalorder %s97, %s113
      %p115 = scmp.eq.s32.totalorder %s21, 0
      %p116 = por %p114, %p115
      %p117 = scmp.le.s32.totalorder 1, %s15
      %p118 = scmp.lt.s32.totalorder %s15, 5
      %p119 = pnand %p117, %p118
      %p120 = pneg %p119
      // Predicated region
      $region9: #{tpu_custom_call.1} parent=5 // pred_check
        _
      $region10: #{tpu_custom_call.1} parent=5 // pred_check_branch
        %122 = sbr.rel (%p119) target = $region12
      $region11: #{tpu_custom_call.1} parent=5 // pred_region
        %s123 = ssub.s32 %s15, 1
        // Predicated region
        $region13: #{tpu_custom_call.1} parent=11 // pred_check
          %p124 = pneg %p62
        $region14: #{tpu_custom_call.1} parent=11 // pred_check_branch
          %126 = sbr.rel (%p124) target = $region16
        $region15: #{tpu_custom_call.1} parent=11 // pred_region
          _
        $region16: #{tpu_custom_call.1} parent=11 // pred_fallthru
          _
        // Predicated region
        $region17: #{tpu_custom_call.1} parent=11 // pred_check
          %p127 = pneg %p83
        $region18: #{tpu_custom_call.1} parent=11 // pred_check_branch
          %129 = sbr.rel (%p127) target = $region20
        $region19: #{tpu_custom_call.1} parent=11 // pred_region
          _
        $region20: #{tpu_custom_call.1} parent=11 // pred_fallthru
          _
      $region12: #{tpu_custom_call.1} parent=5 // pred_fallthru
        _
      %p130 = scmp.lt.s32.totalorder %s15, 4
      // Predicated region
      $region21: #{tpu_custom_call.1} parent=5 // pred_check
        %p131 = pneg %p130
      $region22: #{tpu_custom_call.1} parent=5 // pred_check_branch
        %133 = sbr.rel (%p131) target = $region24
      $region23: #{tpu_custom_call.1} parent=5 // pred_region
        // Predicated region
        $region25: #{tpu_custom_call.1} parent=23 // pred_check
          %p134 = pneg %p35
        $region26: #{tpu_custom_call.1} parent=23 // pred_check_branch
          %136 = sbr.rel (%p134) target = $region28
        $region27: #{tpu_custom_call.1} parent=23 // pred_region
          %s137 = sand.u32 %s25, 1
          %s138 = scalar_lea.sflag [#allocation3], %s137
          %s139 = sand.u32 %s25, 1
          %s140 = smul.addr %s139, 64
          %s141 = scalar_lea.vmem [#allocation2], %s140
          %s142 = smul.u32 8, %s15
          %144 = vsyncadd %s138, 0
          %s145 = smul.addr %s142, 8
          %s146 = scalar_lea.hbm %s0, %s145
          %s148 = sshll.u32 %s146, 4
          %s149 = int_to_ptr.hbm [resolvable:$true] %s148
          %s150 = sshll.u32 %s141, 4
          %s151 = int_to_ptr.vmem [resolvable:$true] %s150
          %153 = dma.hbm_to_vmem [thread:$0]  %s149, 1024, %s151, %s138
        $region28: #{tpu_custom_call.1} parent=23 // pred_fallthru
          _
      $region24: #{tpu_custom_call.1} parent=5 // pred_fallthru
        _
      %p154 = scmp.le.s32.totalorder 1, %s15
      %p155 = scmp.lt.s32.totalorder %s15, 5
      %p156 = pnand %p154, %p155
      %p157 = pneg %p156
      // Predicated region
      $region29: #{tpu_custom_call.1} parent=5 // pred_check
        _
      $region30: #{tpu_custom_call.1} parent=5 // pred_check_branch
        %159 = sbr.rel (%p156) target = $region32
      $region31: #{tpu_custom_call.1} parent=5 // pred_region
        %s160 = ssub.s32 %s15, 1
        %s161 = sand.u32 %s28, 1
        %s162 = scalar_lea.sflag [#allocation3], %s161
        %s163 = sand.u32 %s28, 1
        %s164 = smul.addr %s163, 64
        %s165 = scalar_lea.vmem [#allocation2], %s164
        // Predicated region
        $region33: #{tpu_custom_call.1} parent=31 // pred_check
          %p166 = pneg %p41
        $region34: #{tpu_custom_call.1} parent=31 // pred_check_branch
          %168 = sbr.rel (%p166) target = $region36
        $region35: #{tpu_custom_call.1} parent=31 // pred_region
          %170 = dma.done %s162, 1024
        $region36: #{tpu_custom_call.1} parent=31 // pred_fallthru
          _
        %s171 = sand.u32 %s28, 1
        %s172 = scalar_lea.sflag [#allocation3], %s171
        %s173 = sand.u32 %s28, 1
        %s174 = smul.addr %s173, 64
        %s175 = scalar_lea.vmem [#allocation2], %s174
        %p176 = pneg %p41
        %p177 = pneg %p38
        %p178 = pneg %p62
        %p179 = pneg %p59
        %p180 = pneg %p83
        %p181 = pneg %p80
        %p182 = pneg %p109
        %p183 = pneg %p106
        %s184 = sand.u32 %s96, 1
        %s185 = scalar_lea.sflag [#allocation4], %s184
        %s186 = sand.u32 %s96, 1
        %s187 = smul.addr %s186, 64
        %s188 = scalar_lea.vmem [#allocation5], %s187
        %s189 = smul.u32 8, %s20
        %s190 = smul.u32 8, %s20
        %v191 = vld [vmem:[%s165] sm:$0x3f]
        %v192 = vld [vmem:[%s165 + $0x8] sm:$0x3f]
        %v193 = vld [vmem:[%s165 + $0x10] sm:$0x3f]
        %v194 = vld [vmem:[%s165 + $0x18] sm:$0x3f]
        %v195 = vld [vmem:[%s165 + $0x20] sm:$0x3f]
        %v196 = vld [vmem:[%s165 + $0x28] sm:$0x3f]
        %v197 = vld [vmem:[%s165 + $0x30] sm:$0x3f]
        %v198 = vld [vmem:[%s165 + $0x38] sm:$0x3f]
        %v199 = vld [vmem:[%s1] sm:$0x3f]
        %201 = vset.pattern.permute.xlu0 0
        %202 = vperm.xlu0 %201, %v199
        %v203 = vpop.permute.xlu0 %202
        %v205 = vsub.f32 %v191, %v203
        %v206 = vsub.f32 %v192, %v203
        %v207 = vsub.f32 %v193, %v203
        %v208 = vsub.f32 %v194, %v203
        %v209 = vsub.f32 %v195, %v203
        %v210 = vsub.f32 %v196, %v203
        %v211 = vsub.f32 %v197, %v203
        %v212 = vsub.f32 %v198, %v203
        %v213 = vld [vmem:[%s2] sm:$0x3f]
        %215 = vset.pattern.permute.xlu0 0
        %216 = vperm.xlu0 %215, %v213
        %v217 = vpop.permute.xlu0 %216
        %v219 = vmul.f32 %v205, %v217
        %v220 = vmul.f32 %v206, %v217
        %v221 = vmul.f32 %v207, %v217
        %v222 = vmul.f32 %v208, %v217
        %v223 = vmul.f32 %v209, %v217
        %v224 = vmul.f32 %v210, %v217
        %v225 = vmul.f32 %v211, %v217
        %v226 = vmul.f32 %v212, %v217
        %227 = vst [vmem:[%s188] sm:$0x3f] %v219
        %228 = vst [vmem:[%s188 + $0x8] sm:$0x3f] %v220
        %229 = vst [vmem:[%s188 + $0x10] sm:$0x3f] %v221
        %230 = vst [vmem:[%s188 + $0x18] sm:$0x3f] %v222
        %231 = vst [vmem:[%s188 + $0x20] sm:$0x3f] %v223
        %232 = vst [vmem:[%s188 + $0x28] sm:$0x3f] %v224
        %233 = vst [vmem:[%s188 + $0x30] sm:$0x3f] %v225
        %234 = vst [vmem:[%s188 + $0x38] sm:$0x3f] %v226
        %s235 = sand.u32 %s96, 1
        %s236 = scalar_lea.sflag [#allocation4], %s235
        %s237 = sand.u32 %s96, 1
        %s238 = smul.addr %s237, 64
        %s239 = scalar_lea.vmem [#allocation5], %s238
        // Predicated region
        $region37: #{tpu_custom_call.1} parent=31 // pred_check
          %p240 = pneg %p106
        $region38: #{tpu_custom_call.1} parent=31 // pred_check_branch
          %242 = sbr.rel (%p240) target = $region40
        $region39: #{tpu_custom_call.1} parent=31 // pred_region
          %s243 = smul.u32 8, %s20
          %245 = vsyncadd %s236, 0
          %s246 = smul.addr %s243, 8
          %s247 = scalar_lea.hbm %s3, %s246
          %s249 = sshll.u32 %s239, 4
          %s250 = int_to_ptr.vmem [resolvable:$true] %s249
          %s251 = sshll.u32 %s247, 4
          %s252 = int_to_ptr.hbm [resolvable:$true] %s251
          %254 = dma.vmem_to_hbm [thread:$0]  %s250, 1024, %s252, %s236
        $region40: #{tpu_custom_call.1} parent=31 // pred_fallthru
          _
      $region32: #{tpu_custom_call.1} parent=5 // pred_fallthru
        _
      %p255 = scmp.le.s32.totalorder 2, %s15
      // Predicated region
      $region41: #{tpu_custom_call.1} parent=5 // pred_check
        %p256 = pneg %p255
      $region42: #{tpu_custom_call.1} parent=5 // pred_check_branch
        %258 = sbr.rel (%p256) target = $region44
      $region43: #{tpu_custom_call.1} parent=5 // pred_region
        %s259 = ssub.s32 %s15, 2
        // Predicated region
        $region45: #{tpu_custom_call.1} parent=43 // pred_check
          %p260 = pneg %p112
        $region46: #{tpu_custom_call.1} parent=43 // pred_check_branch
          %262 = sbr.rel (%p260) target = $region48
        $region47: #{tpu_custom_call.1} parent=43 // pred_region
          %s263 = sand.u32 %s97, 1
          %s264 = scalar_lea.sflag [#allocation4], %s263
          %s265 = sand.u32 %s97, 1
          %s266 = smul.addr %s265, 64
          %s267 = scalar_lea.vmem [#allocation5], %s266
          %269 = dma.done %s264, 1024
        $region48: #{tpu_custom_call.1} parent=43 // pred_fallthru
          _
      $region44: #{tpu_custom_call.1} parent=5 // pred_fallthru
        _
    $region6: #{tpu_custom_call.1} parent=1 // loop_footer
      %s19 = sadd.s32 1, %s15
    $region7: #{tpu_custom_call.1} parent=1 // loop_footer_branch
      %14 = sbr.rel target = $region3
    $region8: #{tpu_custom_call.1} parent=1 // loop_exit
      _
    %270 = vsyncpa [#allocation3], 1
    %s271 = scalar_lea.sflag [#allocation3], 1
    %272 = vsyncpa %s271, 1
    %273 = vsyncpa [#allocation4], 1
    %s274 = scalar_lea.sflag [#allocation4], 1
    %275 = vsyncpa %s274, 1

</llo_original>
